<compile_context>
chip_gen: v6e
topology: v6e:2x2x1
jax: 0.10.0
libtpu: 0.0.40
codegen_flags: <defaults>
</compile_context>

<pallas_src>
import functools

import jax
import jax.numpy as jnp
from jax.experimental import pallas as pl
from jax.experimental.pallas import tpu as pltpu


_VMEM_LIMIT_BYTES = 32 * 1024 * 1024   # safe scoped-VMEM limit on v5e/v6e/v7x
_FAST_PATH_MAX_HW = 2048               # fast path only for small feature maps


def _default_block_bytes():
    # Size the x block from the chip's VMEM: big enough (multi-MiB) to amortize
    # the ~0.35 us per-grid-step cost against HBM bandwidth, small enough that
    # the double-buffered input + scratch stay well inside the scoped limit
    # (v7x has only 64 MiB physical VMEM).
    try:
        vmem = pltpu.get_tpu_info().vmem_capacity_bytes
    except Exception:
        vmem = 64 * 1024 * 1024
    return min(8 * 1024 * 1024, vmem // 8)


def _channel_attn_tiled_kernel(x_ref, w1_ref, w2_ref, o_ref, sum_acc, max_acc,
                               *, hw, t_hw, acc_w):
    # x_ref  : (1, C, t_hw)   one batch element, one spatial tile (C on sublane,
    #                         HW on lane -- native NCHW layout)
    # w1_ref : (C_red, C)     fc[0] 1x1-conv weight
    # w2_ref : (C, C_red)     fc[2] 1x1-conv weight
    # o_ref  : (1, C, 1)      sigmoid(channel attention) for this batch element
    # sum_acc: (C, acc_w) f32 running sum; max_acc: (C, acc_w) running max
    t = pl.program_id(1)
    last = pl.num_programs(1) - 1
    n_chunks = t_hw // acc_w
    max_dtype = max_acc.dtype

    @pl.when(t == 0)
    def _init():
        sum_acc[...] = jnp.zeros_like(sum_acc)
        max_acc[...] = jnp.full_like(max_acc, -jnp.inf)

    def accumulate(masked):
        # Fold the tile chunk-by-chunk straight into the VMEM accumulators:
        # lane-parallel VALU adds/maxes only; live set ~= one (C, 128) chunk.
        @pl.loop(0, n_chunks)
        def _(i):
            start = pl.multiple_of(i * acc_w, acc_w)
            chunk = x_ref[0, :, pl.ds(start, acc_w)]
            csum = chunk.astype(jnp.float32)
            cmax = chunk.astype(max_dtype)
            if masked:
                # Final spatial tile may extend past HW; padded lanes are garbage.
                col = (t * t_hw + start
                       + jax.lax.broadcasted_iota(jnp.int32, csum.shape, 1))
                valid = col < hw
                csum = jnp.where(valid, csum, 0.0)
                cmax = jnp.where(valid, cmax,
                                 jnp.array(-jnp.inf, dtype=max_dtype))
            sum_acc[...] = sum_acc[...] + csum
            max_acc[...] = jnp.maximum(max_acc[...], cmax)

    if (hw % t_hw) != 0:
        # Only the final spatial tile has out-of-range lanes: mask just there.
        @pl.when(t == last)
        def _masked_tail():
            accumulate(True)

        @pl.when(t < last)
        def _unmasked_body():
            accumulate(False)
    else:
        accumulate(False)

    @pl.when(t == last)
    def _finalize():
        # One narrow cross-lane (XLU) reduce per batch element, then the MLP.
        avg = jnp.sum(sum_acc[...], axis=1, keepdims=True) * (1.0 / hw)     # (C,1)
        mx = jnp.max(max_acc[...], axis=1, keepdims=True).astype(jnp.float32)
        # Stack {avg, max} as the two columns of a (C, 2) tile via lane-select
        # so the shared MLP runs as 2 dots, not 4.
        col = jax.lax.broadcasted_iota(jnp.int32, (avg.shape[0], 2), 1)
        pooled = jnp.where(col == 0, avg, mx)                               # (C,2)
        h = jnp.maximum(
            jnp.dot(w1_ref[...], pooled, preferred_element_type=jnp.float32),
            0.0)                                                            # (C_red,2)
        z = jnp.dot(w2_ref[...], h, preferred_element_type=jnp.float32)     # (C,2)
        logits = jnp.sum(z, axis=1, keepdims=True)                          # (C,1)
        o_ref[0] = jax.nn.sigmoid(logits).astype(o_ref.dtype)


def _channel_attn_small_kernel(x_ref, w1_ref, w2_ref, o_ref, *, hw, bb):
    # x_ref: (Bb, C, HW); o_ref: (Bb, C, 1).  Whole spatial extent in one block,
    # several batch elements per grid step -> no cross-step accumulators.
    w1 = w1_ref[...]
    w2 = w2_ref[...]
    for b in range(bb):
        xb = x_ref[b].astype(jnp.float32)                        # (C, HW)
        avg = jnp.sum(xb, axis=1, keepdims=True) * (1.0 / hw)    # (C, 1)
        mx = jnp.max(xb, axis=1, keepdims=True)                  # (C, 1)
        col = jax.lax.broadcasted_iota(jnp.int32, (avg.shape[0], 2), 1)
        pooled = jnp.where(col == 0, avg, mx)                    # (C, 2)
        h = jnp.maximum(
            jnp.dot(w1, pooled, preferred_element_type=jnp.float32), 0.0)
        z = jnp.dot(w2, h, preferred_element_type=jnp.float32)
        logits = jnp.sum(z, axis=1, keepdims=True)
        o_ref[b] = jax.nn.sigmoid(logits).astype(o_ref.dtype)


def standard_channel_attention(x_nchw, w1, w2, *, block_bytes=None):
    """
    x_nchw : (B, C, H, W)       f32 or bf16
    w1     : (C_red, C, 1, 1)   weight of nn.Conv2d(C, C_red, 1, bias=False)
    w2     : (C, C_red, 1, 1)   weight of nn.Conv2d(C_red, C, 1, bias=False)
    returns: (B, C, 1, 1)       sigmoid channel-attention map (PyTorch semantics)
    """
    B, C, H, W = x_nchw.shape
    HW = H * W
    C_red = w1.shape[0]

    if block_bytes is None:
        block_bytes = _default_block_bytes()

    x = x_nchw.reshape(B, C, HW)          # free: NCHW is already contiguous
    w1m = w1[:, :, 0, 0]                  # (C_red, C)
    w2m = w2[:, :, 0, 0]                  # (C, C_red)

    itemsize = x_nchw.dtype.itemsize
    lanes_budget = max(block_bytes // (C * itemsize), 128)

    if HW <= min(lanes_budget, _FAST_PATH_MAX_HW):
        # ---- small-HW fast path: block several batch elements per grid step.
        bb = max(1, min(B, 32, block_bytes // (C * HW * itemsize)))
        while B % bb != 0:                # keep the grid exact (no padded blocks)
            bb -= 1
        out = pl.pallas_call(
            functools.partial(_channel_attn_small_kernel, hw=HW, bb=bb),
            out_shape=jax.ShapeDtypeStruct((B, C, 1), x_nchw.dtype),
            grid_spec=pltpu.PrefetchScalarGridSpec(
                num_scalar_prefetch=0,
                grid=(B // bb,),
                in_specs=[
                    pl.BlockSpec((bb, C, HW), lambda b: (b, 0, 0)),
                    pl.BlockSpec((C_red, C), lambda b: (0, 0)),
                    pl.BlockSpec((C, C_red), lambda b: (0, 0)),
                ],
                out_specs=pl.BlockSpec((bb, C, 1), lambda b: (b, 0, 0)),
            ),
            compiler_params=pltpu.CompilerParams(
                dimension_semantics=("parallel",),
                vmem_limit_bytes=_VMEM_LIMIT_BYTES),
        )(x, w1m, w2m)
    else:
        # ---- tiled-HW path: VMEM-budget-sized, lane-aligned spatial tiles.
        hw_padded = ((HW + 127) // 128) * 128
        t_hw = min(max((lanes_budget // 128) * 128, 128), hw_padded)
        acc_w = 128                       # one-vreg-wide running accumulators
        n_t = pl.cdiv(HW, t_hw)
        # bf16 max stays bf16 (exact, half the scratch / VALU work on v6e/v7x);
        # sums always accumulate in f32.
        max_dtype = jnp.float32 if x_nchw.dtype == jnp.float32 else x_nchw.dtype
        kernel = functools.partial(_channel_attn_tiled_kernel,
                                   hw=HW, t_hw=t_hw, acc_w=acc_w)
        out = pl.pallas_call(
            kernel,
            out_shape=jax.ShapeDtypeStruct((B, C, 1), x_nchw.dtype),
            grid_spec=pltpu.PrefetchScalarGridSpec(
                num_scalar_prefetch=0,
                grid=(B, n_t),            # B parallel (outer), HW reduction (inner)
                in_specs=[
                    pl.BlockSpec((1, C, t_hw), lambda b, t: (b, 0, t)),
                    pl.BlockSpec((C_red, C), lambda b, t: (0, 0)),
                    pl.BlockSpec((C, C_red), lambda b, t: (0, 0)),
                ],
                out_specs=pl.BlockSpec((1, C, 1), lambda b, t: (b, 0, 0)),
                scratch_shapes=[
                    pltpu.VMEM((C, acc_w), jnp.float32),   # running sum
                    pltpu.VMEM((C, acc_w), max_dtype),     # running max
                ],
            ),
            compiler_params=pltpu.CompilerParams(
                dimension_semantics=("parallel", "arbitrary"),
                vmem_limit_bytes=_VMEM_LIMIT_BYTES),
        )(x, w1m, w2m)

    return out.reshape(B, C, 1, 1)


def _reference(x_nchw, w1, w2):
    # pure-JAX reference matching the PyTorch forward
    B, C, H, W = x_nchw.shape
    avg = jnp.mean(x_nchw, axis=(2, 3))            # (B, C)
    mx = jnp.max(x_nchw, axis=(2, 3))              # (B, C)
    w1m = w1[:, :, 0, 0]                           # (C_red, C)
    w2m = w2[:, :, 0, 0]                           # (C, C_red)

    def mlp(v):                                    # v: (B, C)
        h = jnp.maximum(v @ w1m.T, 0.0)            # (B, C_red)
        return h @ w2m.T                           # (B, C)

    out = jax.nn.sigmoid(mlp(avg) + mlp(mx))
    return out.reshape(B, C, 1, 1)


if __name__ == "__main__":
    key = jax.random.PRNGKey(0)
    kx, k1, k2, kx2 = jax.random.split(key, 4)

    # Primary example: B=2, C=64, 16x16 spatial, reduction=16.
    B, C, H, W = 2, 64, 16, 16
    reduction = 16
    C_red = C // reduction

    x = jax.random.normal(kx, (B, C, H, W), dtype=jnp.float32)
    w1 = jax.random.normal(k1, (C_red, C, 1, 1), dtype=jnp.float32) * (2.0 / C) ** 0.5
    w2 = jax.random.normal(k2, (C, C_red, 1, 1), dtype=jnp.float32) * (2.0 / C_red) ** 0.5

    # 1) small-HW fast path (batch-blocked, single grid step).
    out = jax.block_until_ready(standard_channel_attention(x, w1, w2))
    ref = _reference(x, w1, w2)
    assert out.shape == (B, C, 1, 1)
    assert jnp.allclose(out, ref, atol=1e-5, rtol=1e-5), \
        "mismatch vs reference (fast path)"

    # 2) tiled-HW path with a masked final tile, forced via a tiny block budget
    #    (HW = 18*18 = 324 -> 3 spatial tiles of 128 lanes, last one partial).
    H2 = W2 = 18
    x2 = jax.random.normal(kx2, (B, C, H2, W2), dtype=jnp.float32)
    out2 = jax.block_until_ready(
        standard_channel_attention(x2, w1, w2, block_bytes=C * 128 * 4))
    ref2 = _reference(x2, w1, w2)
    assert jnp.allclose(out2, ref2, atol=1e-5, rtol=1e-5), \
        "mismatch vs reference (tiled/masked path)"

    # 3) bf16 input through the tiled path (bf16 running-max accumulator).
    x2b = x2.astype(jnp.bfloat16)
    out3 = jax.block_until_ready(
        standard_channel_attention(x2b, w1, w2, block_bytes=C * 128 * 2))
    ref3 = _reference(x2b.astype(jnp.float32), w1, w2)
    assert jnp.allclose(out3.astype(jnp.float32), ref3, atol=2e-2, rtol=2e-2), \
        "mismatch vs reference (bf16 tiled path)"

    print("KERNEL_OK")
</pallas_src>

<mosaic_0001>
module attributes {stable_mosaic.version = 11 : i64} {
  func.func @_channel_attn_small_kernel(%arg0: i32, %arg1: memref<2x64x256xf32, #tpu.memory_space<vmem>>, %arg2: memref<4x64xf32, #tpu.memory_space<vmem>>, %arg3: memref<64x4xf32, #tpu.memory_space<vmem>>, %arg4: memref<2x64x1xf32, #tpu.memory_space<vmem>>) attributes {dimension_semantics = [#tpu.dimension_semantics<parallel>], iteration_bounds = array<i64: 1>, scalar_prefetch = 0 : i64, scratch_operands = 0 : i64, tpu.core_type = #tpu.core_type<tc>, window_params = [{transform_indices = @transform_0, window_bounds = array<i64: 2, 64, 256>}, {pipeline_mode = #tpu.pipeline_mode<synchronous>, transform_indices = @transform_1, window_bounds = array<i64: 4, 64>}, {pipeline_mode = #tpu.pipeline_mode<synchronous>, transform_indices = @transform_2, window_bounds = array<i64: 64, 4>}, {transform_indices = @transform_3, window_bounds = array<i64: 2, 64, 1>}]} {
    %c0 = arith.constant 0 : index
    %c0_0 = arith.constant 0 : index
    %0 = vector.load %arg2[%c0, %c0_0] : memref<4x64xf32, #tpu.memory_space<vmem>>, vector<4x64xf32>
    %c0_1 = arith.constant 0 : index
    %c0_2 = arith.constant 0 : index
    %1 = vector.load %arg3[%c0_1, %c0_2] : memref<64x4xf32, #tpu.memory_space<vmem>>, vector<64x4xf32>
    %c0_3 = arith.constant 0 : index
    %c0_4 = arith.constant 0 : index
    %c0_5 = arith.constant 0 : index
    %2 = vector.load %arg1[%c0_3, %c0_4, %c0_5] : memref<2x64x256xf32, #tpu.memory_space<vmem>>, vector<1x64x256xf32>
    %3 = vector.shape_cast %2 : vector<1x64x256xf32> to vector<64x256xf32>
    %cst = arith.constant dense<0.000000e+00> : vector<64xf32>
    %4 = vector.multi_reduction <add>, %3, %cst [1] : vector<64x256xf32> to vector<64xf32>
    %5 = vector.shape_cast %4 : vector<64xf32> to vector<64x1xf32>
    %cst_6 = arith.constant 3.906250e-03 : f32
    %6 = vector.broadcast %cst_6 : f32 to vector<64x1xf32>
    %7 = arith.mulf %5, %6 : vector<64x1xf32>
    %cst_7 = arith.constant dense<0xFF800000> : vector<64xf32>
    %8 = vector.multi_reduction <maximumf>, %3, %cst_7 [1] : vector<64x256xf32> to vector<64xf32>
    %9 = vector.shape_cast %8 : vector<64xf32> to vector<64x1xf32>
    %10 = tpu.iota {dimensions = array<i32: 1>} : vector<64x2xi32>
    %c0_i32 = arith.constant 0 : i32
    %11 = vector.broadcast %c0_i32 : i32 to vector<64x2xi32>
    %12 = arith.cmpi eq, %10, %11 : vector<64x2xi32>
    %13 = vector.shape_cast %7 : vector<64x1xf32> to vector<64x1xf32>
    %14 = vector.broadcast %13 : vector<64x1xf32> to vector<64x2xf32>
    %15 = vector.shape_cast %9 : vector<64x1xf32> to vector<64x1xf32>
    %16 = vector.broadcast %15 : vector<64x1xf32> to vector<64x2xf32>
    %17 = arith.select %12, %14, %16 : vector<64x2xi1>, vector<64x2xf32>
    %cst_8 = arith.constant dense<0.000000e+00> : vector<4x2xf32>
    %18 = tpu.matmul %0, %17, %cst_8 {dimension_numbers = #tpu.dot_dimension_numbers<[1], [0], [0], [1], [0, 0, 1, 1], [], []>} : vector<4x64xf32>, vector<64x2xf32>, vector<4x2xf32> -> vector<4x2xf32>
    %cst_9 = arith.constant 0.000000e+00 : f32
    %19 = vector.broadcast %cst_9 : f32 to vector<4x2xf32>
    %20 = arith.maximumf %18, %19 : vector<4x2xf32>
    %cst_10 = arith.constant dense<0.000000e+00> : vector<64x2xf32>
    %21 = tpu.matmul %1, %20, %cst_10 {dimension_numbers = #tpu.dot_dimension_numbers<[1], [0], [0], [1], [0, 0, 1, 1], [], []>} : vector<64x4xf32>, vector<4x2xf32>, vector<64x2xf32> -> vector<64x2xf32>
    %cst_11 = arith.constant dense<0.000000e+00> : vector<64xf32>
    %22 = vector.multi_reduction <add>, %21, %cst_11 [1] : vector<64x2xf32> to vector<64xf32>
    %23 = vector.shape_cast %22 : vector<64xf32> to vector<64x1xf32>
    %24 = arith.negf %23 : vector<64x1xf32>
    %25 = math.exp %24 : vector<64x1xf32>
    %cst_12 = arith.constant 1.000000e+00 : f32
    %26 = vector.broadcast %cst_12 : f32 to vector<64x1xf32>
    %27 = arith.addf %26, %25 : vector<64x1xf32>
    %28 = arith.divf %26, %27 : vector<64x1xf32>
    %c0_13 = arith.constant 0 : index
    %c0_14 = arith.constant 0 : index
    %c0_15 = arith.constant 0 : index
    %29 = vector.load %arg4[%c0_13, %c0_14, %c0_15] : memref<2x64x1xf32, #tpu.memory_space<vmem>>, vector<1x64x1xf32>
    %30 = vector.shape_cast %29 : vector<1x64x1xf32> to vector<64x1xf32>
    %31 = vector.shape_cast %28 : vector<64x1xf32> to vector<1x64x1xf32>
    tpu.vector_store %arg4[%c0_13, %c0_14, %c0_15], %31 {strides = array<i32>} : memref<2x64x1xf32, #tpu.memory_space<vmem>>, vector<1x64x1xf32>,
    %c1 = arith.constant 1 : index
    %c0_16 = arith.constant 0 : index
    %c0_17 = arith.constant 0 : index
    %32 = vector.load %arg1[%c1, %c0_16, %c0_17] : memref<2x64x256xf32, #tpu.memory_space<vmem>>, vector<1x64x256xf32>
    %33 = vector.shape_cast %32 : vector<1x64x256xf32> to vector<64x256xf32>
    %cst_18 = arith.constant dense<0.000000e+00> : vector<64xf32>
    %34 = vector.multi_reduction <add>, %33, %cst_18 [1] : vector<64x256xf32> to vector<64xf32>
    %35 = vector.shape_cast %34 : vector<64xf32> to vector<64x1xf32>
    %cst_19 = arith.constant 3.906250e-03 : f32
    %36 = vector.broadcast %cst_19 : f32 to vector<64x1xf32>
    %37 = arith.mulf %35, %36 : vector<64x1xf32>
    %cst_20 = arith.constant dense<0xFF800000> : vector<64xf32>
    %38 = vector.multi_reduction <maximumf>, %33, %cst_20 [1] : vector<64x256xf32> to vector<64xf32>
    %39 = vector.shape_cast %38 : vector<64xf32> to vector<64x1xf32>
    %40 = tpu.iota {dimensions = array<i32: 1>} : vector<64x2xi32>
    %c0_i32_21 = arith.constant 0 : i32
    %41 = vector.broadcast %c0_i32_21 : i32 to vector<64x2xi32>
    %42 = arith.cmpi eq, %40, %41 : vector<64x2xi32>
    %43 = vector.shape_cast %37 : vector<64x1xf32> to vector<64x1xf32>
    %44 = vector.broadcast %43 : vector<64x1xf32> to vector<64x2xf32>
    %45 = vector.shape_cast %39 : vector<64x1xf32> to vector<64x1xf32>
    %46 = vector.broadcast %45 : vector<64x1xf32> to vector<64x2xf32>
    %47 = arith.select %42, %44, %46 : vector<64x2xi1>, vector<64x2xf32>
    %cst_22 = arith.constant dense<0.000000e+00> : vector<4x2xf32>
    %48 = tpu.matmul %0, %47, %cst_22 {dimension_numbers = #tpu.dot_dimension_numbers<[1], [0], [0], [1], [0, 0, 1, 1], [], []>} : vector<4x64xf32>, vector<64x2xf32>, vector<4x2xf32> -> vector<4x2xf32>
    %cst_23 = arith.constant 0.000000e+00 : f32
    %49 = vector.broadcast %cst_23 : f32 to vector<4x2xf32>
    %50 = arith.maximumf %48, %49 : vector<4x2xf32>
    %cst_24 = arith.constant dense<0.000000e+00> : vector<64x2xf32>
    %51 = tpu.matmul %1, %50, %cst_24 {dimension_numbers = #tpu.dot_dimension_numbers<[1], [0], [0], [1], [0, 0, 1, 1], [], []>} : vector<64x4xf32>, vector<4x2xf32>, vector<64x2xf32> -> vector<64x2xf32>
    %cst_25 = arith.constant dense<0.000000e+00> : vector<64xf32>
    %52 = vector.multi_reduction <add>, %51, %cst_25 [1] : vector<64x2xf32> to vector<64xf32>
    %53 = vector.shape_cast %52 : vector<64xf32> to vector<64x1xf32>
    %54 = arith.negf %53 : vector<64x1xf32>
    %55 = math.exp %54 : vector<64x1xf32>
    %cst_26 = arith.constant 1.000000e+00 : f32
    %56 = vector.broadcast %cst_26 : f32 to vector<64x1xf32>
    %57 = arith.addf %56, %55 : vector<64x1xf32>
    %58 = arith.divf %56, %57 : vector<64x1xf32>
    %c1_27 = arith.constant 1 : index
    %c0_28 = arith.constant 0 : index
    %c0_29 = arith.constant 0 : index
    %59 = vector.load %arg4[%c1_27, %c0_28, %c0_29] : memref<2x64x1xf32, #tpu.memory_space<vmem>>, vector<1x64x1xf32>
    %60 = vector.shape_cast %59 : vector<1x64x1xf32> to vector<64x1xf32>
    %61 = vector.shape_cast %58 : vector<64x1xf32> to vector<1x64x1xf32>
    tpu.vector_store %arg4[%c1_27, %c0_28, %c0_29], %61 {strides = array<i32>} : memref<2x64x1xf32, #tpu.memory_space<vmem>>, vector<1x64x1xf32>,
    return
  }
  func.func @transform_0(%arg0: i32) -> (i32, i32, i32) {
    %c0_i32 = arith.constant 0 : i32
    %c0_i32_0 = arith.constant 0 : i32
    %c0_i32_1 = arith.constant 0 : i32
    return %arg0, %c0_i32, %c0_i32_0 : i32, i32, i32
  }
  func.func @transform_1(%arg0: i32) -> (i32, i32) {
    %c0_i32 = arith.constant 0 : i32
    %c0_i32_0 = arith.constant 0 : i32
    %c0_i32_1 = arith.constant 0 : i32
    return %c0_i32, %c0_i32_0 : i32, i32
  }
  func.func @transform_2(%arg0: i32) -> (i32, i32) {
    %c0_i32 = arith.constant 0 : i32
    %c0_i32_0 = arith.constant 0 : i32
    %c0_i32_1 = arith.constant 0 : i32
    return %c0_i32, %c0_i32_0 : i32, i32
  }
  func.func @transform_3(%arg0: i32) -> (i32, i32, i32) {
    %c0_i32 = arith.constant 0 : i32
    %c0_i32_0 = arith.constant 0 : i32
    %c0_i32_1 = arith.constant 0 : i32
    return %arg0, %c0_i32, %c0_i32_0 : i32, i32, i32
  }
}

</mosaic_0001>

<llo_original>
// kernel: tpu_custom_call.1
$region0: #{tpu_custom_call.1}
  #allocation0 [shape = 'u32[]', space=smem, size = 0x4, offset = 0x4, fixed_abs, tag = 'smem constant byte address 0x4 - core index']
  #allocation1 [shape = 'u32[144,128]{1,0:T(1,128)}', space=vmem, size = 0x12000, scoped, tag = 'internal scratch']
  %s0 = inlined_call_operand.hbm [shape: f32[2,64,256], index: 0, kind: input, shape index: {}]
  %s1 = inlined_call_operand.vmem [shape: f32[4,64], index: 1, kind: input, shape index: {}]
  %s2 = inlined_call_operand.vmem [shape: f32[64,4], index: 2, kind: input, shape index: {}]
  %s3 = inlined_call_operand.vmem [shape: f32[2,64,1], index: 3, kind: output, shape index: {}]
  %s4 = sld [smem:[#allocation0]]
  $region26: #{tpu_custom_call.1} parent=0
    _
  %s6 = ssub.s32 1, %s4
  %s7 = scalar_select 0, %s6, %s4
  $region1: #{tpu_custom_call.1} parent=0
    #allocation2 [shape = 'u8[131072]{0}', space=vmem, size = 0x20000, scoped, tag = 'input window, operand 0, single buffered']
    #allocation3 [shape = 's32[1]{0}', space=sflag, size = 0x4, scoped, tag = 'scoped memory for tpu_custom_call.1']
    %8 = vsyncpa [#allocation3], 0
    // Predicated region
    $region2: #{tpu_custom_call.1} parent=1 // pred_check
      _
    $region3: #{tpu_custom_call.1} parent=1 // pred_check_branch
      %10 = sbr.rel (0) target = $region5
    $region4: #{tpu_custom_call.1} parent=1 // pred_region
      %s12 = ssub.s32 4096, 4096
      %13 = vsyncadd [#allocation3], %s12
      %s14 = sshll.u32 [#allocation2], 4
      %s15 = int_to_ptr.vmem [resolvable:$true] %s14
      %20 = dma.hbm_to_vmem [thread:$0]  %s0, 4096, %s15, [#allocation3], 256, 256, 16
    $region5: #{tpu_custom_call.1} parent=1 // pred_fallthru
      _
    // Predicated region
    $region6: #{tpu_custom_call.1} parent=1 // pred_check
      _
    $region7: #{tpu_custom_call.1} parent=1 // pred_check_branch
      %22 = sbr.rel (0) target = $region9
    $region8: #{tpu_custom_call.1} parent=1 // pred_region
      _
    $region9: #{tpu_custom_call.1} parent=1 // pred_fallthru
      _
    // Predicated region
    $region10: #{tpu_custom_call.1} parent=1 // pred_check
      _
    $region11: #{tpu_custom_call.1} parent=1 // pred_check_branch
      %24 = sbr.rel (0) target = $region13
    $region12: #{tpu_custom_call.1} parent=1 // pred_region
      _
    $region13: #{tpu_custom_call.1} parent=1 // pred_fallthru
      _
    // Predicated region
    $region14: #{tpu_custom_call.1} parent=1 // pred_check
      _
    $region15: #{tpu_custom_call.1} parent=1 // pred_check_branch
      %26 = sbr.rel (0) target = $region17
    $region16: #{tpu_custom_call.1} parent=1 // pred_region
      %27 = dma.done [#allocation3], 4096
    $region17: #{tpu_custom_call.1} parent=1 // pred_fallthru
      _
    %v28 = vld [vmem:[%s1] sm:$0xf]
    %v29 = vld [vmem:[%s2] sm:$0xff]
    %v30 = vld [vmem:[%s2 + $0x8] sm:$0xff]
    %v31 = vld [vmem:[%s2 + $0x10] sm:$0xff]
    %v32 = vld [vmem:[%s2 + $0x18] sm:$0xff]
    %v33 = vld [vmem:[%s2 + $0x20] sm:$0xff]
    %v34 = vld [vmem:[%s2 + $0x28] sm:$0xff]
    %v35 = vld [vmem:[%s2 + $0x30] sm:$0xff]
    %v36 = vld [vmem:[%s2 + $0x38] sm:$0xff]
    %v37 = vld [vmem:[#allocation2] sm:$0xff]
    %v38 = vld [vmem:[#allocation2 + $0x8] sm:$0xff]
    %v39 = vld [vmem:[#allocation2 + $0x10] sm:$0xff]
    %v40 = vld [vmem:[#allocation2 + $0x18] sm:$0xff]
    %v41 = vld [vmem:[#allocation2 + $0x20] sm:$0xff]
    %v42 = vld [vmem:[#allocation2 + $0x28] sm:$0xff]
    %v43 = vld [vmem:[#allocation2 + $0x30] sm:$0xff]
    %v44 = vld [vmem:[#allocation2 + $0x38] sm:$0xff]
    %v45 = vld [vmem:[#allocation2 + $0x40] sm:$0xff]
    %v46 = vld [vmem:[#allocation2 + $0x48] sm:$0xff]
    %v47 = vld [vmem:[#allocation2 + $0x50] sm:$0xff]
    %v48 = vld [vmem:[#allocation2 + $0x58] sm:$0xff]
    %v49 = vld [vmem:[#allocation2 + $0x60] sm:$0xff]
    %v50 = vld [vmem:[#allocation2 + $0x68] sm:$0xff]
    %v51 = vld [vmem:[#allocation2 + $0x70] sm:$0xff]
    %v52 = vld [vmem:[#allocation2 + $0x78] sm:$0xff]
    %v53 = vadd.f32 %v37, %v38
    %54 = vadd.xlane.f32.xlu0 %v53
    %v55 = vpop.xlane.xlu0 %54
    %v56 = vadd.f32 %v39, %v40
    %57 = vadd.xlane.f32.xlu0 %v56
    %v58 = vpop.xlane.xlu0 %57
    %v59 = vadd.f32 %v41, %v42
    %60 = vadd.xlane.f32.xlu0 %v59
    %v61 = vpop.xlane.xlu0 %60
    %v62 = vadd.f32 %v43, %v44
    %63 = vadd.xlane.f32.xlu0 %v62
    %v64 = vpop.xlane.xlu0 %63
    %v65 = vadd.f32 %v45, %v46
    %66 = vadd.xlane.f32.xlu0 %v65
    %v67 = vpop.xlane.xlu0 %66
    %v68 = vadd.f32 %v47, %v48
    %69 = vadd.xlane.f32.xlu0 %v68
    %v70 = vpop.xlane.xlu0 %69
    %v71 = vadd.f32 %v49, %v50
    %72 = vadd.xlane.f32.xlu0 %v71
    %v73 = vpop.xlane.xlu0 %72
    %v74 = vadd.f32 %v51, %v52
    %75 = vadd.xlane.f32.xlu0 %v74
    %v76 = vpop.xlane.xlu0 %75
    %v77 = vmul.f32 %v55, 0.00390625
    %v78 = vmul.f32 %v58, 0.00390625
    %v79 = vmul.f32 %v61, 0.00390625
    %v80 = vmul.f32 %v64, 0.00390625
    %v81 = vmul.f32 %v67, 0.00390625
    %v82 = vmul.f32 %v70, 0.00390625
    %v83 = vmul.f32 %v73, 0.00390625
    %v84 = vmul.f32 %v76, 0.00390625
    %v85 = vmax.f32 %v37, %v38
    %86 = vmax.xlane.f32.xlu0 %v85
    %v87 = vpop.xlane.xlu0 %86
    %v88 = vmax.f32 %v39, %v40
    %89 = vmax.xlane.f32.xlu0 %v88
    %v90 = vpop.xlane.xlu0 %89
    %v91 = vmax.f32 %v41, %v42
    %92 = vmax.xlane.f32.xlu0 %v91
    %v93 = vpop.xlane.xlu0 %92
    %v94 = vmax.f32 %v43, %v44
    %95 = vmax.xlane.f32.xlu0 %v94
    %v96 = vpop.xlane.xlu0 %95
    %v97 = vmax.f32 %v45, %v46
    %98 = vmax.xlane.f32.xlu0 %v97
    %v99 = vpop.xlane.xlu0 %98
    %v100 = vmax.f32 %v47, %v48
    %101 = vmax.xlane.f32.xlu0 %v100
    %v102 = vpop.xlane.xlu0 %101
    %v103 = vmax.f32 %v49, %v50
    %104 = vmax.xlane.f32.xlu0 %v103
    %v105 = vpop.xlane.xlu0 %104
    %v106 = vmax.f32 %v51, %v52
    %107 = vmax.xlane.f32.xlu0 %v106
    %v108 = vpop.xlane.xlu0 %107
    %v109 = vlaneseq
    %v110 = vand.u32 %v109, 127
    %vm111 = vcmp.eq.s32.totalorder %v110, 0
    %v112 = vsel %vm111, %v77, %v87
    %v113 = vsel %vm111, %v78, %v90
    %v114 = vsel %vm111, %v79, %v93
    %v115 = vsel %vm111, %v80, %v96
    %v116 = vsel %vm111, %v81, %v99
    %v117 = vsel %vm111, %v82, %v102
    %v118 = vsel %vm111, %v83, %v105
    %v119 = vsel %vm111, %v84, %v108
    %vm120 = vcmask 523264
    %v122 = vsel %vm120, %v28, 0
    %124 = vmatprep.subr.mxu0 0.0
    %125 = vmatpush1.msra.mxu0 0.0
    %126 = vmatprep.subr.mxu0 0.0
    %127 = vmatpush1.msra.mxu0 0.0
    %128 = vmatprep.subr.mxu0 0.0
    %129 = vmatpush1.msra.mxu0 0.0
    %130 = vmatprep.subr.mxu0 0.0
    %131 = vmatpush1.msra.mxu0 0.0
    %132 = vmatprep.subr.mxu0 0.0
    %133 = vmatpush1.msra.mxu0 0.0
    %134 = vmatprep.subr.mxu0 0.0
    %135 = vmatpush1.msra.mxu0 0.0
    %136 = vmatprep.subr.mxu0 0.0
    %137 = vmatpush1.msra.mxu0 0.0
    %138 = vmatprep.subr.mxu0 0.0
    %139 = vmatpush1.msra.mxu0 0.0
    %140 = vmatprep.subr.mxu0 0.0
    %141 = vmatpush1.msra.mxu0 %v119
    %142 = vmatprep.subr.mxu0 0.0
    %143 = vmatpush1.msra.mxu0 %v118
    %144 = vmatprep.subr.mxu0 0.0
    %145 = vmatpush1.msra.mxu0 %v117
    %146 = vmatprep.subr.mxu0 0.0
    %147 = vmatpush1.msra.mxu0 %v116
    %148 = vmatprep.subr.mxu0 0.0
    %149 = vmatpush1.msra.mxu0 %v115
    %150 = vmatprep.subr.mxu0 0.0
    %151 = vmatpush1.msra.mxu0 %v114
    %152 = vmatprep.subr.mxu0 0.0
    %153 = vmatpush1.msra.mxu0 %v113
    %154 = vmatprep.subr.mxu0 0.0
    %155 = vmatpush1.msra.mxu0 %v112
    %156 = vmatprep.subr.mxu0 0.0
    %157 = vmatpush2.msra.mxu0 0.0
    %158 = vmatprep.subr.mxu0 0.0
    %159 = vmatpush2.msra.mxu0 0.0
    %160 = vmatprep.subr.mxu0 0.0
    %161 = vmatpush2.msra.mxu0 0.0
    %162 = vmatprep.subr.mxu0 0.0
    %163 = vmatpush2.msra.mxu0 0.0
    %164 = vmatprep.subr.mxu0 0.0
    %165 = vmatpush2.msra.mxu0 0.0
    %166 = vmatprep.subr.mxu0 0.0
    %167 = vmatpush2.msra.mxu0 0.0
    %168 = vmatprep.subr.mxu0 0.0
    %169 = vmatpush2.msra.mxu0 0.0
    %170 = vmatprep.subr.mxu0 0.0
    %171 = vmatpush2.msra.mxu0 0.0
    %172 = vmatprep.subr.mxu0 0.0
    %173 = vmatpush2.msra.mxu0 0.0
    %174 = vmatprep.subr.mxu0 0.0
    %175 = vmatpush2.msra.mxu0 0.0
    %176 = vmatprep.subr.mxu0 0.0
    %177 = vmatpush2.msra.mxu0 0.0
    %178 = vmatprep.subr.mxu0 0.0
    %179 = vmatpush2.msra.mxu0 0.0
    %180 = vmatprep.subr.mxu0 0.0
    %181 = vmatpush2.msra.mxu0 0.0
    %182 = vmatprep.subr.mxu0 0.0
    %183 = vmatpush2.msra.mxu0 0.0
    %184 = vmatprep.subr.mxu0 0.0
    %185 = vmatpush2.msra.mxu0 0.0
    %186 = vmatprep.subr.mxu0 0.0
    %187 = vmatpush2.msra.mxu0 0.0
    %188 = vmatprep.mubr.f32.mxu0 0.0
    %189 = vmatmul.mubr.f32.gmra.mxu0 %v122
    %v190 = vpop.f32.mrf.mxu0
    %v191 = vadd.f32 0.0, %v190
    %v192 = vpop.f32.mrf.mxu0
    %193 = vdwg.mxu0
    %v194 = vmax.f32 %v191, 0.0
    %vm195 = vcmask 31744
    %v197 = vsel %vm195, %v29, 0
    %v200 = vsel %vm195, %v30, 0
    %v203 = vsel %vm195, %v31, 0
    %v206 = vsel %vm195, %v32, 0
    %v209 = vsel %vm195, %v33, 0
    %v212 = vsel %vm195, %v34, 0
    %v215 = vsel %vm195, %v35, 0
    %v218 = vsel %vm195, %v36, 0
    %vm220 = vcmask 1043456
    %v222 = vsel %vm220, %v194, 0
    %224 = vmatprep.subr.mxu0 0.0
    %225 = vmatpush1.msra.mxu0 0.0
    %226 = vmatprep.subr.mxu0 0.0
    %227 = vmatpush1.msra.mxu0 0.0
    %228 = vmatprep.subr.mxu0 0.0
    %229 = vmatpush1.msra.mxu0 0.0
    %230 = vmatprep.subr.mxu0 0.0
    %231 = vmatpush1.msra.mxu0 0.0
    %232 = vmatprep.subr.mxu0 0.0
    %233 = vmatpush1.msra.mxu0 0.0
    %234 = vmatprep.subr.mxu0 0.0
    %235 = vmatpush1.msra.mxu0 0.0
    %236 = vmatprep.subr.mxu0 0.0
    %237 = vmatpush1.msra.mxu0 0.0
    %238 = vmatprep.subr.mxu0 0.0
    %239 = vmatpush1.msra.mxu0 0.0
    %240 = vmatprep.subr.mxu0 0.0
    %241 = vmatpush1.msra.mxu0 0.0
    %242 = vmatprep.subr.mxu0 0.0
    %243 = vmatpush1.msra.mxu0 0.0
    %244 = vmatprep.subr.mxu0 0.0
    %245 = vmatpush1.msra.mxu0 0.0
    %246 = vmatprep.subr.mxu0 0.0
    %247 = vmatpush1.msra.mxu0 0.0
    %248 = vmatprep.subr.mxu0 0.0
    %249 = vmatpush1.msra.mxu0 0.0
    %250 = vmatprep.subr.mxu0 0.0
    %251 = vmatpush1.msra.mxu0 0.0
    %252 = vmatprep.subr.mxu0 0.0
    %253 = vmatpush1.msra.mxu0 0.0
    %254 = vmatprep.subr.mxu0 0.0
    %255 = vmatpush1.msra.mxu0 %v222
    %256 = vmatprep.subr.mxu0 0.0
    %257 = vmatpush2.msra.mxu0 0.0
    %258 = vmatprep.subr.mxu0 0.0
    %259 = vmatpush2.msra.mxu0 0.0
    %260 = vmatprep.subr.mxu0 0.0
    %261 = vmatpush2.msra.mxu0 0.0
    %262 = vmatprep.subr.mxu0 0.0
    %263 = vmatpush2.msra.mxu0 0.0
    %264 = vmatprep.subr.mxu0 0.0
    %265 = vmatpush2.msra.mxu0 0.0
    %266 = vmatprep.subr.mxu0 0.0
    %267 = vmatpush2.msra.mxu0 0.0
    %268 = vmatprep.subr.mxu0 0.0
    %269 = vmatpush2.msra.mxu0 0.0
    %270 = vmatprep.subr.mxu0 0.0
    %271 = vmatpush2.msra.mxu0 0.0
    %272 = vmatprep.subr.mxu0 0.0
    %273 = vmatpush2.msra.mxu0 0.0
    %274 = vmatprep.subr.mxu0 0.0
    %275 = vmatpush2.msra.mxu0 0.0
    %276 = vmatprep.subr.mxu0 0.0
    %277 = vmatpush2.msra.mxu0 0.0
    %278 = vmatprep.subr.mxu0 0.0
    %279 = vmatpush2.msra.mxu0 0.0
    %280 = vmatprep.subr.mxu0 0.0
    %281 = vmatpush2.msra.mxu0 0.0
    %282 = vmatprep.subr.mxu0 0.0
    %283 = vmatpush2.msra.mxu0 0.0
    %284 = vmatprep.subr.mxu0 0.0
    %285 = vmatpush2.msra.mxu0 0.0
    %286 = vmatprep.subr.mxu0 0.0
    %287 = vmatpush2.msra.mxu0 0.0
    %288 = vmatprep.mubr.f32.mxu0 0.0
    %289 = vmatmul.mubr.f32.gmra.mxu0 %v197
    %v290 = vpop.f32.mrf.mxu0
    %v291 = vadd.f32 0.0, %v290
    %v292 = vpop.f32.mrf.mxu0
    %293 = vmatprep.mubr.f32.mxu0 0.0
    %294 = vmatmul.mubr.f32.gmra.mxu0 %v200
    %v295 = vpop.f32.mrf.mxu0
    %v296 = vadd.f32 0.0, %v295
    %v297 = vpop.f32.mrf.mxu0
    %298 = vmatprep.mubr.f32.mxu0 0.0
    %299 = vmatmul.mubr.f32.gmra.mxu0 %v203
    %v300 = vpop.f32.mrf.mxu0
    %v301 = vadd.f32 0.0, %v300
    %v302 = vpop.f32.mrf.mxu0
    %303 = vmatprep.mubr.f32.mxu0 0.0
    %304 = vmatmul.mubr.f32.gmra.mxu0 %v206
    %v305 = vpop.f32.mrf.mxu0
    %v306 = vadd.f32 0.0, %v305
    %v307 = vpop.f32.mrf.mxu0
    %308 = vmatprep.mubr.f32.mxu0 0.0
    %309 = vmatmul.mubr.f32.gmra.mxu0 %v209
    %v310 = vpop.f32.mrf.mxu0
    %v311 = vadd.f32 0.0, %v310
    %v312 = vpop.f32.mrf.mxu0
    %313 = vmatprep.mubr.f32.mxu0 0.0
    %314 = vmatmul.mubr.f32.gmra.mxu0 %v212
    %v315 = vpop.f32.mrf.mxu0
    %v316 = vadd.f32 0.0, %v315
    %v317 = vpop.f32.mrf.mxu0
    %318 = vmatprep.mubr.f32.mxu0 0.0
    %319 = vmatmul.mubr.f32.gmra.mxu0 %v215
    %v320 = vpop.f32.mrf.mxu0
    %v321 = vadd.f32 0.0, %v320
    %v322 = vpop.f32.mrf.mxu0
    %323 = vmatprep.mubr.f32.mxu0 0.0
    %324 = vmatmul.mubr.f32.gmra.mxu0 %v218
    %v325 = vpop.f32.mrf.mxu0
    %v326 = vadd.f32 0.0, %v325
    %v327 = vpop.f32.mrf.mxu0
    %328 = vdwg.mxu0
    %vm329 = vcmask 15360
    %v330 = vsel %vm329, %v291, 0.0
    %331 = vadd.xlane.f32.xlu0 %v330
    %v332 = vpop.xlane.xlu0 %331
    %v333 = vsel %vm329, %v296, 0.0
    %334 = vadd.xlane.f32.xlu0 %v333
    %v335 = vpop.xlane.xlu0 %334
    %v336 = vsel %vm329, %v301, 0.0
    %337 = vadd.xlane.f32.xlu0 %v336
    %v338 = vpop.xlane.xlu0 %337
    %v339 = vsel %vm329, %v306, 0.0
    %340 = vadd.xlane.f32.xlu0 %v339
    %v341 = vpop.xlane.xlu0 %340
    %v342 = vsel %vm329, %v311, 0.0
    %343 = vadd.xlane.f32.xlu0 %v342
    %v344 = vpop.xlane.xlu0 %343
    %v345 = vsel %vm329, %v316, 0.0
    %346 = vadd.xlane.f32.xlu0 %v345
    %v347 = vpop.xlane.xlu0 %346
    %v348 = vsel %vm329, %v321, 0.0
    %349 = vadd.xlane.f32.xlu0 %v348
    %v350 = vpop.xlane.xlu0 %349
    %v351 = vsel %vm329, %v326, 0.0
    %352 = vadd.xlane.f32.xlu0 %v351
    %v353 = vpop.xlane.xlu0 %352
    %v354 = vxor.u32 %v332, 2147483648
    %v355 = vxor.u32 %v335, 2147483648
    %v356 = vxor.u32 %v338, 2147483648
    %v357 = vxor.u32 %v341, 2147483648
    %v358 = vxor.u32 %v344, 2147483648
    %v359 = vxor.u32 %v347, 2147483648
    %v360 = vxor.u32 %v350, 2147483648
    %v361 = vxor.u32 %v353, 2147483648
    %v362 = vmul.f32 %v354, 1.442695
    %v363 = vpow.pop %v362
    %v364 = vmul.f32 %v355, 1.442695
    %v365 = vpow.pop %v364
    %v366 = vmul.f32 %v356, 1.442695
    %v367 = vpow.pop %v366
    %v368 = vmul.f32 %v357, 1.442695
    %v369 = vpow.pop %v368
    %v370 = vmul.f32 %v358, 1.442695
    %v371 = vpow.pop %v370
    %v372 = vmul.f32 %v359, 1.442695
    %v373 = vpow.pop %v372
    %v374 = vmul.f32 %v360, 1.442695
    %v375 = vpow.pop %v374
    %v376 = vmul.f32 %v361, 1.442695
    %v377 = vpow.pop %v376
    %v378 = vadd.f32 %v363, 1.0
    %v379 = vadd.f32 %v365, 1.0
    %v380 = vadd.f32 %v367, 1.0
    %v381 = vadd.f32 %v369, 1.0
    %v382 = vadd.f32 %v371, 1.0
    %v383 = vadd.f32 %v373, 1.0
    %v384 = vadd.f32 %v375, 1.0
    %v385 = vadd.f32 %v377, 1.0
    %v386 = vrcp.pop %v378
    %v387 = vmul.f32 1.0, %v386
    %v388 = vrcp.pop %v379
    %v389 = vmul.f32 1.0, %v388
    %v390 = vrcp.pop %v380
    %v391 = vmul.f32 1.0, %v390
    %v392 = vrcp.pop %v381
    %v393 = vmul.f32 1.0, %v392
    %v394 = vrcp.pop %v382
    %v395 = vmul.f32 1.0, %v394
    %v396 = vrcp.pop %v383
    %v397 = vmul.f32 1.0, %v396
    %v398 = vrcp.pop %v384
    %v399 = vmul.f32 1.0, %v398
    %v400 = vrcp.pop %v385
    %v401 = vmul.f32 1.0, %v400
    %vm402 = vcmask 7168
    %403 = vst.msk [vmem:[%s3] sm:$0xff] %vm402, %v387
    %404 = vst.msk [vmem:[%s3 + $0x8] sm:$0xff] %vm402, %v389
    %405 = vst.msk [vmem:[%s3 + $0x10] sm:$0xff] %vm402, %v391
    %406 = vst.msk [vmem:[%s3 + $0x18] sm:$0xff] %vm402, %v393
    %407 = vst.msk [vmem:[%s3 + $0x20] sm:$0xff] %vm402, %v395
    %408 = vst.msk [vmem:[%s3 + $0x28] sm:$0xff] %vm402, %v397
    %409 = vst.msk [vmem:[%s3 + $0x30] sm:$0xff] %vm402, %v399
    %410 = vst.msk [vmem:[%s3 + $0x38] sm:$0xff] %vm402, %v401
    %s411 = scalar_lea.vmem [#allocation2], 128
    %v412 = vld [vmem:[%s411] sm:$0xff]
    %v413 = vld [vmem:[%s411 + $0x8] sm:$0xff]
    %v414 = vld [vmem:[%s411 + $0x10] sm:$0xff]
    %v415 = vld [vmem:[%s411 + $0x18] sm:$0xff]
    %v416 = vld [vmem:[%s411 + $0x20] sm:$0xff]
    %v417 = vld [vmem:[%s411 + $0x28] sm:$0xff]
    %v418 = vld [vmem:[%s411 + $0x30] sm:$0xff]
    %v419 = vld [vmem:[%s411 + $0x38] sm:$0xff]
    %v420 = vld [vmem:[%s411 + $0x40] sm:$0xff]
    %v421 = vld [vmem:[%s411 + $0x48] sm:$0xff]
    %v422 = vld [vmem:[%s411 + $0x50] sm:$0xff]
    %v423 = vld [vmem:[%s411 + $0x58] sm:$0xff]
    %v424 = vld [vmem:[%s411 + $0x60] sm:$0xff]
    %v425 = vld [vmem:[%s411 + $0x68] sm:$0xff]
    %v426 = vld [vmem:[%s411 + $0x70] sm:$0xff]
    %v427 = vld [vmem:[%s411 + $0x78] sm:$0xff]
    %v428 = vadd.f32 %v412, %v413
    %429 = vadd.xlane.f32.xlu0 %v428
    %v430 = vpop.xlane.xlu0 %429
    %v431 = vadd.f32 %v414, %v415
    %432 = vadd.xlane.f32.xlu0 %v431
    %v433 = vpop.xlane.xlu0 %432
    %v434 = vadd.f32 %v416, %v417
    %435 = vadd.xlane.f32.xlu0 %v434
    %v436 = vpop.xlane.xlu0 %435
    %v437 = vadd.f32 %v418, %v419
    %438 = vadd.xlane.f32.xlu0 %v437
    %v439 = vpop.xlane.xlu0 %438
    %v440 = vadd.f32 %v420, %v421
    %441 = vadd.xlane.f32.xlu0 %v440
    %v442 = vpop.xlane.xlu0 %441
    %v443 = vadd.f32 %v422, %v423
    %444 = vadd.xlane.f32.xlu0 %v443
    %v445 = vpop.xlane.xlu0 %444
    %v446 = vadd.f32 %v424, %v425
    %447 = vadd.xlane.f32.xlu0 %v446
    %v448 = vpop.xlane.xlu0 %447
    %v449 = vadd.f32 %v426, %v427
    %450 = vadd.xlane.f32.xlu0 %v449
    %v451 = vpop.xlane.xlu0 %450
    %v452 = vmul.f32 %v430, 0.00390625
    %v453 = vmul.f32 %v433, 0.00390625
    %v454 = vmul.f32 %v436, 0.00390625
    %v455 = vmul.f32 %v439, 0.00390625
    %v456 = vmul.f32 %v442, 0.00390625
    %v457 = vmul.f32 %v445, 0.00390625
    %v458 = vmul.f32 %v448, 0.00390625
    %v459 = vmul.f32 %v451, 0.00390625
    %v460 = vmax.f32 %v412, %v413
    %461 = vmax.xlane.f32.xlu0 %v460
    %v462 = vpop.xlane.xlu0 %461
    %v463 = vmax.f32 %v414, %v415
    %464 = vmax.xlane.f32.xlu0 %v463
    %v465 = vpop.xlane.xlu0 %464
    %v466 = vmax.f32 %v416, %v417
    %467 = vmax.xlane.f32.xlu0 %v466
    %v468 = vpop.xlane.xlu0 %467
    %v469 = vmax.f32 %v418, %v419
    %470 = vmax.xlane.f32.xlu0 %v469
    %v471 = vpop.xlane.xlu0 %470
    %v472 = vmax.f32 %v420, %v421
    %473 = vmax.xlane.f32.xlu0 %v472
    %v474 = vpop.xlane.xlu0 %473
    %v475 = vmax.f32 %v422, %v423
    %476 = vmax.xlane.f32.xlu0 %v475
    %v477 = vpop.xlane.xlu0 %476
    %v478 = vmax.f32 %v424, %v425
    %479 = vmax.xlane.f32.xlu0 %v478
    %v480 = vpop.xlane.xlu0 %479
    %v481 = vmax.f32 %v426, %v427
    %482 = vmax.xlane.f32.xlu0 %v481
    %v483 = vpop.xlane.xlu0 %482
    %v484 = vsel %vm111, %v452, %v462
    %v485 = vsel %vm111, %v453, %v465
    %v486 = vsel %vm111, %v454, %v468
    %v487 = vsel %vm111, %v455, %v471
    %v488 = vsel %vm111, %v456, %v474
    %v489 = vsel %vm111, %v457, %v477
    %v490 = vsel %vm111, %v458, %v480
    %v491 = vsel %vm111, %v459, %v483
    %492 = vmatprep.subr.mxu0 0.0
    %493 = vmatpush1.msra.mxu0 0.0
    %494 = vmatprep.subr.mxu0 0.0
    %495 = vmatpush1.msra.mxu0 0.0
    %496 = vmatprep.subr.mxu0 0.0
    %497 = vmatpush1.msra.mxu0 0.0
    %498 = vmatprep.subr.mxu0 0.0
    %499 = vmatpush1.msra.mxu0 0.0
    %500 = vmatprep.subr.mxu0 0.0
    %501 = vmatpush1.msra.mxu0 0.0
    %502 = vmatprep.subr.mxu0 0.0
    %503 = vmatpush1.msra.mxu0 0.0
    %504 = vmatprep.subr.mxu0 0.0
    %505 = vmatpush1.msra.mxu0 0.0
    %506 = vmatprep.subr.mxu0 0.0
    %507 = vmatpush1.msra.mxu0 0.0
    %508 = vmatprep.subr.mxu0 0.0
    %509 = vmatpush1.msra.mxu0 %v491
    %510 = vmatprep.subr.mxu0 0.0
    %511 = vmatpush1.msra.mxu0 %v490
    %512 = vmatprep.subr.mxu0 0.0
    %513 = vmatpush1.msra.mxu0 %v489
    %514 = vmatprep.subr.mxu0 0.0
    %515 = vmatpush1.msra.mxu0 %v488
    %516 = vmatprep.subr.mxu0 0.0
    %517 = vmatpush1.msra.mxu0 %v487
    %518 = vmatprep.subr.mxu0 0.0
    %519 = vmatpush1.msra.mxu0 %v486
    %520 = vmatprep.subr.mxu0 0.0
    %521 = vmatpush1.msra.mxu0 %v485
    %522 = vmatprep.subr.mxu0 0.0
    %523 = vmatpush1.msra.mxu0 %v484
    %524 = vmatprep.subr.mxu0 0.0
    %525 = vmatpush2.msra.mxu0 0.0
    %526 = vmatprep.subr.mxu0 0.0
    %527 = vmatpush2.msra.mxu0 0.0
    %528 = vmatprep.subr.mxu0 0.0
    %529 = vmatpush2.msra.mxu0 0.0
    %530 = vmatprep.subr.mxu0 0.0
    %531 = vmatpush2.msra.mxu0 0.0
    %532 = vmatprep.subr.mxu0 0.0
    %533 = vmatpush2.msra.mxu0 0.0
    %534 = vmatprep.subr.mxu0 0.0
    %535 = vmatpush2.msra.mxu0 0.0
    %536 = vmatprep.subr.mxu0 0.0
    %537 = vmatpush2.msra.mxu0 0.0
    %538 = vmatprep.subr.mxu0 0.0
    %539 = vmatpush2.msra.mxu0 0.0
    %540 = vmatprep.subr.mxu0 0.0
    %541 = vmatpush2.msra.mxu0 0.0
    %542 = vmatprep.subr.mxu0 0.0
    %543 = vmatpush2.msra.mxu0 0.0
    %544 = vmatprep.subr.mxu0 0.0
    %545 = vmatpush2.msra.mxu0 0.0
    %546 = vmatprep.subr.mxu0 0.0
    %547 = vmatpush2.msra.mxu0 0.0
    %548 = vmatprep.subr.mxu0 0.0
    %549 = vmatpush2.msra.mxu0 0.0
    %550 = vmatprep.subr.mxu0 0.0
    %551 = vmatpush2.msra.mxu0 0.0
    %552 = vmatprep.subr.mxu0 0.0
    %553 = vmatpush2.msra.mxu0 0.0
    %554 = vmatprep.subr.mxu0 0.0
    %555 = vmatpush2.msra.mxu0 0.0
    %556 = vmatprep.mubr.f32.mxu0 0.0
    %557 = vmatmul.mubr.f32.gmra.mxu0 %v122
    %v558 = vpop.f32.mrf.mxu0
    %v559 = vadd.f32 0.0, %v558
    %v560 = vpop.f32.mrf.mxu0
    %561 = vdwg.mxu0
    %v562 = vmax.f32 %v559, 0.0
    %v564 = vsel %vm220, %v562, 0
    %566 = vmatprep.subr.mxu0 0.0
    %567 = vmatpush1.msra.mxu0 0.0
    %568 = vmatprep.subr.mxu0 0.0
    %569 = vmatpush1.msra.mxu0 0.0
    %570 = vmatprep.subr.mxu0 0.0
    %571 = vmatpush1.msra.mxu0 0.0
    %572 = vmatprep.subr.mxu0 0.0
    %573 = vmatpush1.msra.mxu0 0.0
    %574 = vmatprep.subr.mxu0 0.0
    %575 = vmatpush1.msra.mxu0 0.0
    %576 = vmatprep.subr.mxu0 0.0
    %577 = vmatpush1.msra.mxu0 0.0
    %578 = vmatprep.subr.mxu0 0.0
    %579 = vmatpush1.msra.mxu0 0.0
    %580 = vmatprep.subr.mxu0 0.0
    %581 = vmatpush1.msra.mxu0 0.0
    %582 = vmatprep.subr.mxu0 0.0
    %583 = vmatpush1.msra.mxu0 0.0
    %584 = vmatprep.subr.mxu0 0.0
    %585 = vmatpush1.msra.mxu0 0.0
    %586 = vmatprep.subr.mxu0 0.0
    %587 = vmatpush1.msra.mxu0 0.0
    %588 = vmatprep.subr.mxu0 0.0
    %589 = vmatpush1.msra.mxu0 0.0
    %590 = vmatprep.subr.mxu0 0.0
    %591 = vmatpush1.msra.mxu0 0.0
    %592 = vmatprep.subr.mxu0 0.0
    %593 = vmatpush1.msra.mxu0 0.0
    %594 = vmatprep.subr.mxu0 0.0
    %595 = vmatpush1.msra.mxu0 0.0
    %596 = vmatprep.subr.mxu0 0.0
    %597 = vmatpush1.msra.mxu0 %v564
    %598 = vmatprep.subr.mxu0 0.0
    %599 = vmatpush2.msra.mxu0 0.0
    %600 = vmatprep.subr.mxu0 0.0
    %601 = vmatpush2.msra.mxu0 0.0
    %602 = vmatprep.subr.mxu0 0.0
    %603 = vmatpush2.msra.mxu0 0.0
    %604 = vmatprep.subr.mxu0 0.0
    %605 = vmatpush2.msra.mxu0 0.0
    %606 = vmatprep.subr.mxu0 0.0
    %607 = vmatpush2.msra.mxu0 0.0
    %608 = vmatprep.subr.mxu0 0.0
    %609 = vmatpush2.msra.mxu0 0.0
    %610 = vmatprep.subr.mxu0 0.0
    %611 = vmatpush2.msra.mxu0 0.0
    %612 = vmatprep.subr.mxu0 0.0
    %613 = vmatpush2.msra.mxu0 0.0
    %614 = vmatprep.subr.mxu0 0.0
    %615 = vmatpush2.msra.mxu0 0.0
    %616 = vmatprep.subr.mxu0 0.0
    %617 = vmatpush2.msra.mxu0 0.0
    %618 = vmatprep.subr.mxu0 0.0
    %619 = vmatpush2.msra.mxu0 0.0
    %620 = vmatprep.subr.mxu0 0.0
    %621 = vmatpush2.msra.mxu0 0.0
    %622 = vmatprep.subr.mxu0 0.0
    %623 = vmatpush2.msra.mxu0 0.0
    %624 = vmatprep.subr.mxu0 0.0
    %625 = vmatpush2.msra.mxu0 0.0
    %626 = vmatprep.subr.mxu0 0.0
    %627 = vmatpush2.msra.mxu0 0.0
    %628 = vmatprep.subr.mxu0 0.0
    %629 = vmatpush2.msra.mxu0 0.0
    %630 = vmatprep.mubr.f32.mxu0 0.0
    %631 = vmatmul.mubr.f32.gmra.mxu0 %v197
    %v632 = vpop.f32.mrf.mxu0
    %v633 = vadd.f32 0.0, %v632
    %v634 = vpop.f32.mrf.mxu0
    %635 = vmatprep.mubr.f32.mxu0 0.0
    %636 = vmatmul.mubr.f32.gmra.mxu0 %v200
    %v637 = vpop.f32.mrf.mxu0
    %v638 = vadd.f32 0.0, %v637
    %v639 = vpop.f32.mrf.mxu0
    %640 = vmatprep.mubr.f32.mxu0 0.0
    %641 = vmatmul.mubr.f32.gmra.mxu0 %v203
    %v642 = vpop.f32.mrf.mxu0
    %v643 = vadd.f32 0.0, %v642
    %v644 = vpop.f32.mrf.mxu0
    %645 = vmatprep.mubr.f32.mxu0 0.0
    %646 = vmatmul.mubr.f32.gmra.mxu0 %v206
    %v647 = vpop.f32.mrf.mxu0
    %v648 = vadd.f32 0.0, %v647
    %v649 = vpop.f32.mrf.mxu0
    %650 = vmatprep.mubr.f32.mxu0 0.0
    %651 = vmatmul.mubr.f32.gmra.mxu0 %v209
    %v652 = vpop.f32.mrf.mxu0
    %v653 = vadd.f32 0.0, %v652
    %v654 = vpop.f32.mrf.mxu0
    %655 = vmatprep.mubr.f32.mxu0 0.0
    %656 = vmatmul.mubr.f32.gmra.mxu0 %v212
    %v657 = vpop.f32.mrf.mxu0
    %v658 = vadd.f32 0.0, %v657
    %v659 = vpop.f32.mrf.mxu0
    %660 = vmatprep.mubr.f32.mxu0 0.0
    %661 = vmatmul.mubr.f32.gmra.mxu0 %v215
    %v662 = vpop.f32.mrf.mxu0
    %v663 = vadd.f32 0.0, %v662
    %v664 = vpop.f32.mrf.mxu0
    %665 = vmatprep.mubr.f32.mxu0 0.0
    %666 = vmatmul.mubr.f32.gmra.mxu0 %v218
    %v667 = vpop.f32.mrf.mxu0
    %v668 = vadd.f32 0.0, %v667
    %v669 = vpop.f32.mrf.mxu0
    %670 = vdwg.mxu0
    %v671 = vsel %vm329, %v633, 0.0
    %672 = vadd.xlane.f32.xlu0 %v671
    %v673 = vpop.xlane.xlu0 %672
    %v674 = vsel %vm329, %v638, 0.0
    %675 = vadd.xlane.f32.xlu0 %v674
    %v676 = vpop.xlane.xlu0 %675
    %v677 = vsel %vm329, %v643, 0.0
    %678 = vadd.xlane.f32.xlu0 %v677
    %v679 = vpop.xlane.xlu0 %678
    %v680 = vsel %vm329, %v648, 0.0
    %681 = vadd.xlane.f32.xlu0 %v680
    %v682 = vpop.xlane.xlu0 %681
    %v683 = vsel %vm329, %v653, 0.0
    %684 = vadd.xlane.f32.xlu0 %v683
    %v685 = vpop.xlane.xlu0 %684
    %v686 = vsel %vm329, %v658, 0.0
    %687 = vadd.xlane.f32.xlu0 %v686
    %v688 = vpop.xlane.xlu0 %687
    %v689 = vsel %vm329, %v663, 0.0
    %690 = vadd.xlane.f32.xlu0 %v689
    %v691 = vpop.xlane.xlu0 %690
    %v692 = vsel %vm329, %v668, 0.0
    %693 = vadd.xlane.f32.xlu0 %v692
    %v694 = vpop.xlane.xlu0 %693
    %v695 = vxor.u32 %v673, 2147483648
    %v696 = vxor.u32 %v676, 2147483648
    %v697 = vxor.u32 %v679, 2147483648
    %v698 = vxor.u32 %v682, 2147483648
    %v699 = vxor.u32 %v685, 2147483648
    %v700 = vxor.u32 %v688, 2147483648
    %v701 = vxor.u32 %v691, 2147483648
    %v702 = vxor.u32 %v694, 2147483648
    %v703 = vmul.f32 %v695, 1.442695
    %v704 = vpow.pop %v703
    %v705 = vmul.f32 %v696, 1.442695
    %v706 = vpow.pop %v705
    %v707 = vmul.f32 %v697, 1.442695
    %v708 = vpow.pop %v707
    %v709 = vmul.f32 %v698, 1.442695
    %v710 = vpow.pop %v709
    %v711 = vmul.f32 %v699, 1.442695
    %v712 = vpow.pop %v711
    %v713 = vmul.f32 %v700, 1.442695
    %v714 = vpow.pop %v713
    %v715 = vmul.f32 %v701, 1.442695
    %v716 = vpow.pop %v715
    %v717 = vmul.f32 %v702, 1.442695
    %v718 = vpow.pop %v717
    %v719 = vadd.f32 %v704, 1.0
    %v720 = vadd.f32 %v706, 1.0
    %v721 = vadd.f32 %v708, 1.0
    %v722 = vadd.f32 %v710, 1.0
    %v723 = vadd.f32 %v712, 1.0
    %v724 = vadd.f32 %v714, 1.0
    %v725 = vadd.f32 %v716, 1.0
    %v726 = vadd.f32 %v718, 1.0
    %v727 = vrcp.pop %v719
    %v728 = vmul.f32 1.0, %v727
    %v729 = vrcp.pop %v720
    %v730 = vmul.f32 1.0, %v729
    %v731 = vrcp.pop %v721
    %v732 = vmul.f32 1.0, %v731
    %v733 = vrcp.pop %v722
    %v734 = vmul.f32 1.0, %v733
    %v735 = vrcp.pop %v723
    %v736 = vmul.f32 1.0, %v735
    %v737 = vrcp.pop %v724
    %v738 = vmul.f32 1.0, %v737
    %v739 = vrcp.pop %v725
    %v740 = vmul.f32 1.0, %v739
    %v741 = vrcp.pop %v726
    %v742 = vmul.f32 1.0, %v741
    %s743 = scalar_lea.vmem %s3, 64
    %744 = vst.msk [vmem:[%s743] sm:$0xff] %vm402, %v728
    %745 = vst.msk [vmem:[%s743 + $0x8] sm:$0xff] %vm402, %v730
    %746 = vst.msk [vmem:[%s743 + $0x10] sm:$0xff] %vm402, %v732
    %747 = vst.msk [vmem:[%s743 + $0x18] sm:$0xff] %vm402, %v734
    %748 = vst.msk [vmem:[%s743 + $0x20] sm:$0xff] %vm402, %v736
    %749 = vst.msk [vmem:[%s743 + $0x28] sm:$0xff] %vm402, %v738
    %750 = vst.msk [vmem:[%s743 + $0x30] sm:$0xff] %vm402, %v740
    %751 = vst.msk [vmem:[%s743 + $0x38] sm:$0xff] %vm402, %v742
    // Predicated region
    $region18: #{tpu_custom_call.1} parent=1 // pred_check
      _
    $region19: #{tpu_custom_call.1} parent=1 // pred_check_branch
      %753 = sbr.rel (0) target = $region21
    $region20: #{tpu_custom_call.1} parent=1 // pred_region
      _
    $region21: #{tpu_custom_call.1} parent=1 // pred_fallthru
      _
    // Predicated region
    $region22: #{tpu_custom_call.1} parent=1 // pred_check
      _
    $region23: #{tpu_custom_call.1} parent=1 // pred_check_branch
      %755 = sbr.rel (0) target = $region25
    $region24: #{tpu_custom_call.1} parent=1 // pred_region
      _
    $region25: #{tpu_custom_call.1} parent=1 // pred_fallthru
      _
    %756 = vsyncpa [#allocation3], 1

</llo_original>
